<compile_context>
chip_gen: v5e
topology: v5e:2x2
jax: 0.10.0
libtpu: 0.0.40
codegen_flags: <defaults>
</compile_context>

<pallas_src>
import functools

import jax
import jax.numpy as jnp
from jax.experimental import pallas as pl
from jax.experimental.pallas import tpu as pltpu


# ----------------------------------------------------------------------------
# Kernel: all RNN layers (wavefront over time x layer) + Linear(H,1) + tanh.
# ----------------------------------------------------------------------------
def _fused_rnn_kernel(*refs, num_layers, seq_len, batch_block):
    """refs layout (in_refs..., out_refs...):
        refs[0]                : x      (T, BB, I)   time-major batch block
        refs[1 + 3*l + 0]      : W_ih^T (D_in, H)    for layer l
        refs[1 + 3*l + 1]      : W_hh^T (H, H)
        refs[1 + 3*l + 2]      : b      (1, H)       (= b_ih + b_hh)
        refs[1 + 3*L]          : fc_w   (1, H)       (Linear weight row)
        refs[2 + 3*L]          : fc_b   (1, 1)
        refs[3 + 3*L]          : out    (BB, 1)
    """
    L, T, BB = num_layers, seq_len, batch_block

    x_ref = refs[0]
    layer_refs = refs[1:1 + 3 * L]
    fcw_ref = refs[1 + 3 * L]
    fcb_ref = refs[2 + 3 * L]
    out_ref = refs[3 + 3 * L]

    f32 = jnp.float32

    # Hoist all weights out of the time loop (loaded from VMEM refs once).
    wih = [layer_refs[3 * l][...] for l in range(L)]        # (D_in, H)
    whh = [layer_refs[3 * l + 1][...] for l in range(L)]    # (H, H)
    bias = [layer_refs[3 * l + 2][...] for l in range(L)]   # (1, H)
    H = whh[0].shape[0]

    # Recurrent states, one per layer (h0 = 0, matching nn.RNN default).
    h = [jnp.zeros((BB, H), f32) for _ in range(L)]

    # Wavefront recurrence: t outer, l inner.  The traced DAG gives node
    # (t, l) exactly two predecessors -- h_{l-1}(t) and h_l(t-1) -- so the
    # critical path is ~T+L-1 (matmul + tanh) latencies; the two per-node
    # matmuls are mutually independent and co-schedule on the MXU.
    for t in range(T):
        x_t = x_ref[t]                                       # (BB, I)
        for l in range(L):
            inp = x_t if l == 0 else h[l - 1]                # input at time t
            pre = (
                jnp.dot(inp, wih[l], preferred_element_type=f32)
                + jnp.dot(h[l], whh[l], preferred_element_type=f32)
                + bias[l]
            )
            h[l] = jnp.tanh(pre)                             # EUP

    # Final head on the last timestep of the last layer.  Avoid a (BB,H)@(H,1)
    # MXU matmul: VPU broadcast-multiply + XLU lane reduction instead.
    logits = (
        jnp.sum(h[L - 1] * fcw_ref[...], axis=-1, keepdims=True)
        + fcb_ref[...]
    )                                                        # (BB, 1)
    out_ref[...] = jnp.tanh(logits).astype(out_ref.dtype)


# ----------------------------------------------------------------------------
# Wrapper
# ----------------------------------------------------------------------------
@jax.jit
def rnn_forward(x, layer_params, fc_w_row, fc_b):
    """x: (B, T, I) batch-first float32.  Returns (B, 1).

    layer_params: list of (W_ih^T (D_in,H), W_hh^T (H,H), b (1,H)) per layer.
    fc_w_row: (1, H), fc_b: (1, 1).
    """
    B, T, I = x.shape
    L = len(layer_params)

    # Sublane-align the padded batch.  For B > 8 pad to a multiple of 16 and
    # split into 2 batch blocks so the "parallel" grid axis can feed v7x's two
    # TensorCores; for tiny batches a single 8-row block suffices.
    if B <= 8:
        Bp, BB = 8, 8
    else:
        Bp = ((B + 15) // 16) * 16
        BB = Bp // 2
    num_blocks = Bp // BB

    # Time-major layout once in the wrapper; padded rows are junk that never
    # contaminates real rows (all matmuls are row-independent) and are sliced
    # off below.
    x_tm = jnp.transpose(x, (1, 0, 2)).astype(jnp.float32)   # (T, B, I)
    if Bp > B:
        x_tm = jnp.pad(x_tm, ((0, 0), (0, Bp - B), (0, 0)))  # (T, Bp, I)

    flat_weights = [w for triple in layer_params for w in triple]

    # x is blocked over the batch; every weight gets a constant index_map so
    # it stays VMEM-resident across grid steps.
    in_specs = [pl.BlockSpec((T, BB, I), lambda i: (0, i, 0))]
    for w in flat_weights + [fc_w_row, fc_b]:
        in_specs.append(pl.BlockSpec(w.shape, lambda i: (0, 0)))

    out_pad = pl.pallas_call(
        functools.partial(
            _fused_rnn_kernel, num_layers=L, seq_len=T, batch_block=BB
        ),
        grid=(num_blocks,),
        out_shape=jax.ShapeDtypeStruct((Bp, 1), jnp.float32),
        in_specs=in_specs,
        out_specs=pl.BlockSpec((BB, 1), lambda i: (i, 0)),
        compiler_params=pltpu.CompilerParams(
            dimension_semantics=("parallel",),
            vmem_limit_bytes=32 * 1024 * 1024,
        ),
    )(x_tm, *flat_weights, fc_w_row, fc_b)

    return out_pad[:B]


# ----------------------------------------------------------------------------
# Deterministic parameter init (matches nn.RNN / nn.Linear shapes)
# ----------------------------------------------------------------------------
def init_params(key, input_size, hidden_size, num_layers):
    H = hidden_size
    bound = 1.0 / jnp.sqrt(jnp.float32(H))
    layer_params = []
    for l in range(num_layers):
        d_in = input_size if l == 0 else H
        key, k1, k2, k3, k4 = jax.random.split(key, 5)
        w_ih = jax.random.uniform(k1, (H, d_in), jnp.float32, -bound, bound)
        w_hh = jax.random.uniform(k2, (H, H), jnp.float32, -bound, bound)
        b_ih = jax.random.uniform(k3, (H,), jnp.float32, -bound, bound)
        b_hh = jax.random.uniform(k4, (H,), jnp.float32, -bound, bound)
        # Pre-transpose weights and fold both biases together for the kernel.
        layer_params.append((w_ih.T, w_hh.T, (b_ih + b_hh).reshape(1, H)))
    key, k5, k6 = jax.random.split(key, 3)
    fc_w = jax.random.uniform(k5, (1, H), jnp.float32, -bound, bound)
    fc_b = jax.random.uniform(k6, (1,), jnp.float32, -bound, bound)
    return layer_params, fc_w, fc_b.reshape(1, 1)            # fc_w kept as row


# ----------------------------------------------------------------------------
# Pure-JAX reference (correctness check)
# ----------------------------------------------------------------------------
def rnn_forward_ref(x, layer_params, fc_w_row, fc_b, hidden_size):
    B, T, _ = x.shape
    seq = x.astype(jnp.float32)
    for (wih_t, whh_t, b) in layer_params:
        h = jnp.zeros((B, hidden_size), jnp.float32)
        outs = []
        for t in range(T):
            h = jnp.tanh(seq[:, t, :] @ wih_t + h @ whh_t + b)
            outs.append(h)
        seq = jnp.stack(outs, axis=1)
    return jnp.tanh(seq[:, -1, :] @ fc_w_row.T + fc_b)


if __name__ == "__main__":
    # Small shapes consistent with the module's forward: x (batch, seq, input)
    B, T, I, H, L = 2, 8, 4, 32, 2

    key = jax.random.PRNGKey(0)
    key, kx = jax.random.split(key)
    x = jax.random.normal(kx, (B, T, I), jnp.float32)

    layer_params, fc_w, fc_b = init_params(key, I, H, L)

    out = rnn_forward(x, layer_params, fc_w, fc_b)
    out = jax.block_until_ready(out)

    ref = rnn_forward_ref(x, layer_params, fc_w, fc_b, H)
    assert out.shape == (B, 1), out.shape
    assert jnp.allclose(out, ref, atol=1e-5, rtol=1e-5), (out, ref)

    print("KERNEL_OK")
</pallas_src>

<mosaic_0001>
module attributes {stable_mosaic.version = 11 : i64} {
  func.func @_fused_rnn_kernel(%arg0: i32, %arg1: memref<8x8x4xf32, #tpu.memory_space<vmem>>, %arg2: memref<4x32xf32, #tpu.memory_space<vmem>>, %arg3: memref<32x32xf32, #tpu.memory_space<vmem>>, %arg4: memref<1x32xf32, #tpu.memory_space<vmem>>, %arg5: memref<32x32xf32, #tpu.memory_space<vmem>>, %arg6: memref<32x32xf32, #tpu.memory_space<vmem>>, %arg7: memref<1x32xf32, #tpu.memory_space<vmem>>, %arg8: memref<1x32xf32, #tpu.memory_space<vmem>>, %arg9: memref<1x1xf32, #tpu.memory_space<vmem>>, %arg10: memref<8x1xf32, #tpu.memory_space<vmem>>) attributes {dimension_semantics = [#tpu.dimension_semantics<parallel>], iteration_bounds = array<i64: 1>, scalar_prefetch = 0 : i64, scratch_operands = 0 : i64, tpu.core_type = #tpu.core_type<tc>, window_params = [{transform_indices = @transform_0, window_bounds = array<i64: 8, 8, 4>}, {pipeline_mode = #tpu.pipeline_mode<synchronous>, transform_indices = @transform_1, window_bounds = array<i64: 4, 32>}, {pipeline_mode = #tpu.pipeline_mode<synchronous>, transform_indices = @transform_2, window_bounds = array<i64: 32, 32>}, {pipeline_mode = #tpu.pipeline_mode<synchronous>, transform_indices = @transform_3, window_bounds = array<i64: 1, 32>}, {pipeline_mode = #tpu.pipeline_mode<synchronous>, transform_indices = @transform_4, window_bounds = array<i64: 32, 32>}, {pipeline_mode = #tpu.pipeline_mode<synchronous>, transform_indices = @transform_5, window_bounds = array<i64: 32, 32>}, {pipeline_mode = #tpu.pipeline_mode<synchronous>, transform_indices = @transform_6, window_bounds = array<i64: 1, 32>}, {pipeline_mode = #tpu.pipeline_mode<synchronous>, transform_indices = @transform_7, window_bounds = array<i64: 1, 32>}, {pipeline_mode = #tpu.pipeline_mode<synchronous>, transform_indices = @transform_8, window_bounds = array<i64: 1, 1>}, {transform_indices = @transform_9, window_bounds = array<i64: 8, 1>}]} {
    %c0 = arith.constant 0 : index
    %c0_0 = arith.constant 0 : index
    %0 = vector.load %arg2[%c0, %c0_0] : memref<4x32xf32, #tpu.memory_space<vmem>>, vector<4x32xf32>
    %c0_1 = arith.constant 0 : index
    %c0_2 = arith.constant 0 : index
    %1 = vector.load %arg5[%c0_1, %c0_2] : memref<32x32xf32, #tpu.memory_space<vmem>>, vector<32x32xf32>
    %c0_3 = arith.constant 0 : index
    %c0_4 = arith.constant 0 : index
    %2 = vector.load %arg3[%c0_3, %c0_4] : memref<32x32xf32, #tpu.memory_space<vmem>>, vector<32x32xf32>
    %c0_5 = arith.constant 0 : index
    %c0_6 = arith.constant 0 : index
    %3 = vector.load %arg6[%c0_5, %c0_6] : memref<32x32xf32, #tpu.memory_space<vmem>>, vector<32x32xf32>
    %c0_7 = arith.constant 0 : index
    %c0_8 = arith.constant 0 : index
    %4 = vector.load %arg4[%c0_7, %c0_8] : memref<1x32xf32, #tpu.memory_space<vmem>>, vector<1x32xf32>
    %c0_9 = arith.constant 0 : index
    %c0_10 = arith.constant 0 : index
    %5 = vector.load %arg7[%c0_9, %c0_10] : memref<1x32xf32, #tpu.memory_space<vmem>>, vector<1x32xf32>
    %cst = arith.constant 0.000000e+00 : f32
    %6 = vector.broadcast %cst : f32 to vector<8x32xf32>
    %cst_11 = arith.constant 0.000000e+00 : f32
    %7 = vector.broadcast %cst_11 : f32 to vector<8x32xf32>
    %c0_12 = arith.constant 0 : index
    %c0_13 = arith.constant 0 : index
    %c0_14 = arith.constant 0 : index
    %8 = vector.load %arg1[%c0_12, %c0_13, %c0_14] : memref<8x8x4xf32, #tpu.memory_space<vmem>>, vector<1x8x4xf32>
    %9 = vector.shape_cast %8 : vector<1x8x4xf32> to vector<8x4xf32>
    %cst_15 = arith.constant dense<0.000000e+00> : vector<8x32xf32>
    %10 = tpu.matmul %9, %0, %cst_15 {dimension_numbers = #tpu.dot_dimension_numbers<[1], [0], [0], [1], [0, 0, 1, 1], [], []>} : vector<8x4xf32>, vector<4x32xf32>, vector<8x32xf32> -> vector<8x32xf32>
    %cst_16 = arith.constant dense<0.000000e+00> : vector<8x32xf32>
    %11 = tpu.matmul %6, %2, %cst_16 {dimension_numbers = #tpu.dot_dimension_numbers<[1], [0], [0], [1], [0, 0, 1, 1], [], []>} : vector<8x32xf32>, vector<32x32xf32>, vector<8x32xf32> -> vector<8x32xf32>
    %12 = arith.addf %10, %11 : vector<8x32xf32>
    %13 = vector.broadcast %4 : vector<1x32xf32> to vector<8x32xf32>
    %14 = arith.addf %12, %13 : vector<8x32xf32>
    %15 = math.tanh %14 : vector<8x32xf32>
    %cst_17 = arith.constant dense<0.000000e+00> : vector<8x32xf32>
    %16 = tpu.matmul %15, %1, %cst_17 {dimension_numbers = #tpu.dot_dimension_numbers<[1], [0], [0], [1], [0, 0, 1, 1], [], []>} : vector<8x32xf32>, vector<32x32xf32>, vector<8x32xf32> -> vector<8x32xf32>
    %cst_18 = arith.constant dense<0.000000e+00> : vector<8x32xf32>
    %17 = tpu.matmul %7, %3, %cst_18 {dimension_numbers = #tpu.dot_dimension_numbers<[1], [0], [0], [1], [0, 0, 1, 1], [], []>} : vector<8x32xf32>, vector<32x32xf32>, vector<8x32xf32> -> vector<8x32xf32>
    %18 = arith.addf %16, %17 : vector<8x32xf32>
    %19 = vector.broadcast %5 : vector<1x32xf32> to vector<8x32xf32>
    %20 = arith.addf %18, %19 : vector<8x32xf32>
    %21 = math.tanh %20 : vector<8x32xf32>
    %c1 = arith.constant 1 : index
    %c0_19 = arith.constant 0 : index
    %c0_20 = arith.constant 0 : index
    %22 = vector.load %arg1[%c1, %c0_19, %c0_20] : memref<8x8x4xf32, #tpu.memory_space<vmem>>, vector<1x8x4xf32>
    %23 = vector.shape_cast %22 : vector<1x8x4xf32> to vector<8x4xf32>
    %cst_21 = arith.constant dense<0.000000e+00> : vector<8x32xf32>
    %24 = tpu.matmul %23, %0, %cst_21 {dimension_numbers = #tpu.dot_dimension_numbers<[1], [0], [0], [1], [0, 0, 1, 1], [], []>} : vector<8x4xf32>, vector<4x32xf32>, vector<8x32xf32> -> vector<8x32xf32>
    %cst_22 = arith.constant dense<0.000000e+00> : vector<8x32xf32>
    %25 = tpu.matmul %15, %2, %cst_22 {dimension_numbers = #tpu.dot_dimension_numbers<[1], [0], [0], [1], [0, 0, 1, 1], [], []>} : vector<8x32xf32>, vector<32x32xf32>, vector<8x32xf32> -> vector<8x32xf32>
    %26 = arith.addf %24, %25 : vector<8x32xf32>
    %27 = vector.broadcast %4 : vector<1x32xf32> to vector<8x32xf32>
    %28 = arith.addf %26, %27 : vector<8x32xf32>
    %29 = math.tanh %28 : vector<8x32xf32>
    %cst_23 = arith.constant dense<0.000000e+00> : vector<8x32xf32>
    %30 = tpu.matmul %29, %1, %cst_23 {dimension_numbers = #tpu.dot_dimension_numbers<[1], [0], [0], [1], [0, 0, 1, 1], [], []>} : vector<8x32xf32>, vector<32x32xf32>, vector<8x32xf32> -> vector<8x32xf32>
    %cst_24 = arith.constant dense<0.000000e+00> : vector<8x32xf32>
    %31 = tpu.matmul %21, %3, %cst_24 {dimension_numbers = #tpu.dot_dimension_numbers<[1], [0], [0], [1], [0, 0, 1, 1], [], []>} : vector<8x32xf32>, vector<32x32xf32>, vector<8x32xf32> -> vector<8x32xf32>
    %32 = arith.addf %30, %31 : vector<8x32xf32>
    %33 = vector.broadcast %5 : vector<1x32xf32> to vector<8x32xf32>
    %34 = arith.addf %32, %33 : vector<8x32xf32>
    %35 = math.tanh %34 : vector<8x32xf32>
    %c2 = arith.constant 2 : index
    %c0_25 = arith.constant 0 : index
    %c0_26 = arith.constant 0 : index
    %36 = vector.load %arg1[%c2, %c0_25, %c0_26] : memref<8x8x4xf32, #tpu.memory_space<vmem>>, vector<1x8x4xf32>
    %37 = vector.shape_cast %36 : vector<1x8x4xf32> to vector<8x4xf32>
    %cst_27 = arith.constant dense<0.000000e+00> : vector<8x32xf32>
    %38 = tpu.matmul %37, %0, %cst_27 {dimension_numbers = #tpu.dot_dimension_numbers<[1], [0], [0], [1], [0, 0, 1, 1], [], []>} : vector<8x4xf32>, vector<4x32xf32>, vector<8x32xf32> -> vector<8x32xf32>
    %cst_28 = arith.constant dense<0.000000e+00> : vector<8x32xf32>
    %39 = tpu.matmul %29, %2, %cst_28 {dimension_numbers = #tpu.dot_dimension_numbers<[1], [0], [0], [1], [0, 0, 1, 1], [], []>} : vector<8x32xf32>, vector<32x32xf32>, vector<8x32xf32> -> vector<8x32xf32>
    %40 = arith.addf %38, %39 : vector<8x32xf32>
    %41 = vector.broadcast %4 : vector<1x32xf32> to vector<8x32xf32>
    %42 = arith.addf %40, %41 : vector<8x32xf32>
    %43 = math.tanh %42 : vector<8x32xf32>
    %cst_29 = arith.constant dense<0.000000e+00> : vector<8x32xf32>
    %44 = tpu.matmul %43, %1, %cst_29 {dimension_numbers = #tpu.dot_dimension_numbers<[1], [0], [0], [1], [0, 0, 1, 1], [], []>} : vector<8x32xf32>, vector<32x32xf32>, vector<8x32xf32> -> vector<8x32xf32>
    %cst_30 = arith.constant dense<0.000000e+00> : vector<8x32xf32>
    %45 = tpu.matmul %35, %3, %cst_30 {dimension_numbers = #tpu.dot_dimension_numbers<[1], [0], [0], [1], [0, 0, 1, 1], [], []>} : vector<8x32xf32>, vector<32x32xf32>, vector<8x32xf32> -> vector<8x32xf32>
    %46 = arith.addf %44, %45 : vector<8x32xf32>
    %47 = vector.broadcast %5 : vector<1x32xf32> to vector<8x32xf32>
    %48 = arith.addf %46, %47 : vector<8x32xf32>
    %49 = math.tanh %48 : vector<8x32xf32>
    %c3 = arith.constant 3 : index
    %c0_31 = arith.constant 0 : index
    %c0_32 = arith.constant 0 : index
    %50 = vector.load %arg1[%c3, %c0_31, %c0_32] : memref<8x8x4xf32, #tpu.memory_space<vmem>>, vector<1x8x4xf32>
    %51 = vector.shape_cast %50 : vector<1x8x4xf32> to vector<8x4xf32>
    %cst_33 = arith.constant dense<0.000000e+00> : vector<8x32xf32>
    %52 = tpu.matmul %51, %0, %cst_33 {dimension_numbers = #tpu.dot_dimension_numbers<[1], [0], [0], [1], [0, 0, 1, 1], [], []>} : vector<8x4xf32>, vector<4x32xf32>, vector<8x32xf32> -> vector<8x32xf32>
    %cst_34 = arith.constant dense<0.000000e+00> : vector<8x32xf32>
    %53 = tpu.matmul %43, %2, %cst_34 {dimension_numbers = #tpu.dot_dimension_numbers<[1], [0], [0], [1], [0, 0, 1, 1], [], []>} : vector<8x32xf32>, vector<32x32xf32>, vector<8x32xf32> -> vector<8x32xf32>
    %54 = arith.addf %52, %53 : vector<8x32xf32>
    %55 = vector.broadcast %4 : vector<1x32xf32> to vector<8x32xf32>
    %56 = arith.addf %54, %55 : vector<8x32xf32>
    %57 = math.tanh %56 : vector<8x32xf32>
    %cst_35 = arith.constant dense<0.000000e+00> : vector<8x32xf32>
    %58 = tpu.matmul %57, %1, %cst_35 {dimension_numbers = #tpu.dot_dimension_numbers<[1], [0], [0], [1], [0, 0, 1, 1], [], []>} : vector<8x32xf32>, vector<32x32xf32>, vector<8x32xf32> -> vector<8x32xf32>
    %cst_36 = arith.constant dense<0.000000e+00> : vector<8x32xf32>
    %59 = tpu.matmul %49, %3, %cst_36 {dimension_numbers = #tpu.dot_dimension_numbers<[1], [0], [0], [1], [0, 0, 1, 1], [], []>} : vector<8x32xf32>, vector<32x32xf32>, vector<8x32xf32> -> vector<8x32xf32>
    %60 = arith.addf %58, %59 : vector<8x32xf32>
    %61 = vector.broadcast %5 : vector<1x32xf32> to vector<8x32xf32>
    %62 = arith.addf %60, %61 : vector<8x32xf32>
    %63 = math.tanh %62 : vector<8x32xf32>
    %c4 = arith.constant 4 : index
    %c0_37 = arith.constant 0 : index
    %c0_38 = arith.constant 0 : index
    %64 = vector.load %arg1[%c4, %c0_37, %c0_38] : memref<8x8x4xf32, #tpu.memory_space<vmem>>, vector<1x8x4xf32>
    %65 = vector.shape_cast %64 : vector<1x8x4xf32> to vector<8x4xf32>
    %cst_39 = arith.constant dense<0.000000e+00> : vector<8x32xf32>
    %66 = tpu.matmul %65, %0, %cst_39 {dimension_numbers = #tpu.dot_dimension_numbers<[1], [0], [0], [1], [0, 0, 1, 1], [], []>} : vector<8x4xf32>, vector<4x32xf32>, vector<8x32xf32> -> vector<8x32xf32>
    %cst_40 = arith.constant dense<0.000000e+00> : vector<8x32xf32>
    %67 = tpu.matmul %57, %2, %cst_40 {dimension_numbers = #tpu.dot_dimension_numbers<[1], [0], [0], [1], [0, 0, 1, 1], [], []>} : vector<8x32xf32>, vector<32x32xf32>, vector<8x32xf32> -> vector<8x32xf32>
    %68 = arith.addf %66, %67 : vector<8x32xf32>
    %69 = vector.broadcast %4 : vector<1x32xf32> to vector<8x32xf32>
    %70 = arith.addf %68, %69 : vector<8x32xf32>
    %71 = math.tanh %70 : vector<8x32xf32>
    %cst_41 = arith.constant dense<0.000000e+00> : vector<8x32xf32>
    %72 = tpu.matmul %71, %1, %cst_41 {dimension_numbers = #tpu.dot_dimension_numbers<[1], [0], [0], [1], [0, 0, 1, 1], [], []>} : vector<8x32xf32>, vector<32x32xf32>, vector<8x32xf32> -> vector<8x32xf32>
    %cst_42 = arith.constant dense<0.000000e+00> : vector<8x32xf32>
    %73 = tpu.matmul %63, %3, %cst_42 {dimension_numbers = #tpu.dot_dimension_numbers<[1], [0], [0], [1], [0, 0, 1, 1], [], []>} : vector<8x32xf32>, vector<32x32xf32>, vector<8x32xf32> -> vector<8x32xf32>
    %74 = arith.addf %72, %73 : vector<8x32xf32>
    %75 = vector.broadcast %5 : vector<1x32xf32> to vector<8x32xf32>
    %76 = arith.addf %74, %75 : vector<8x32xf32>
    %77 = math.tanh %76 : vector<8x32xf32>
    %c5 = arith.constant 5 : index
    %c0_43 = arith.constant 0 : index
    %c0_44 = arith.constant 0 : index
    %78 = vector.load %arg1[%c5, %c0_43, %c0_44] : memref<8x8x4xf32, #tpu.memory_space<vmem>>, vector<1x8x4xf32>
    %79 = vector.shape_cast %78 : vector<1x8x4xf32> to vector<8x4xf32>
    %cst_45 = arith.constant dense<0.000000e+00> : vector<8x32xf32>
    %80 = tpu.matmul %79, %0, %cst_45 {dimension_numbers = #tpu.dot_dimension_numbers<[1], [0], [0], [1], [0, 0, 1, 1], [], []>} : vector<8x4xf32>, vector<4x32xf32>, vector<8x32xf32> -> vector<8x32xf32>
    %cst_46 = arith.constant dense<0.000000e+00> : vector<8x32xf32>
    %81 = tpu.matmul %71, %2, %cst_46 {dimension_numbers = #tpu.dot_dimension_numbers<[1], [0], [0], [1], [0, 0, 1, 1], [], []>} : vector<8x32xf32>, vector<32x32xf32>, vector<8x32xf32> -> vector<8x32xf32>
    %82 = arith.addf %80, %81 : vector<8x32xf32>
    %83 = vector.broadcast %4 : vector<1x32xf32> to vector<8x32xf32>
    %84 = arith.addf %82, %83 : vector<8x32xf32>
    %85 = math.tanh %84 : vector<8x32xf32>
    %cst_47 = arith.constant dense<0.000000e+00> : vector<8x32xf32>
    %86 = tpu.matmul %85, %1, %cst_47 {dimension_numbers = #tpu.dot_dimension_numbers<[1], [0], [0], [1], [0, 0, 1, 1], [], []>} : vector<8x32xf32>, vector<32x32xf32>, vector<8x32xf32> -> vector<8x32xf32>
    %cst_48 = arith.constant dense<0.000000e+00> : vector<8x32xf32>
    %87 = tpu.matmul %77, %3, %cst_48 {dimension_numbers = #tpu.dot_dimension_numbers<[1], [0], [0], [1], [0, 0, 1, 1], [], []>} : vector<8x32xf32>, vector<32x32xf32>, vector<8x32xf32> -> vector<8x32xf32>
    %88 = arith.addf %86, %87 : vector<8x32xf32>
    %89 = vector.broadcast %5 : vector<1x32xf32> to vector<8x32xf32>
    %90 = arith.addf %88, %89 : vector<8x32xf32>
    %91 = math.tanh %90 : vector<8x32xf32>
    %c6 = arith.constant 6 : index
    %c0_49 = arith.constant 0 : index
    %c0_50 = arith.constant 0 : index
    %92 = vector.load %arg1[%c6, %c0_49, %c0_50] : memref<8x8x4xf32, #tpu.memory_space<vmem>>, vector<1x8x4xf32>
    %93 = vector.shape_cast %92 : vector<1x8x4xf32> to vector<8x4xf32>
    %cst_51 = arith.constant dense<0.000000e+00> : vector<8x32xf32>
    %94 = tpu.matmul %93, %0, %cst_51 {dimension_numbers = #tpu.dot_dimension_numbers<[1], [0], [0], [1], [0, 0, 1, 1], [], []>} : vector<8x4xf32>, vector<4x32xf32>, vector<8x32xf32> -> vector<8x32xf32>
    %cst_52 = arith.constant dense<0.000000e+00> : vector<8x32xf32>
    %95 = tpu.matmul %85, %2, %cst_52 {dimension_numbers = #tpu.dot_dimension_numbers<[1], [0], [0], [1], [0, 0, 1, 1], [], []>} : vector<8x32xf32>, vector<32x32xf32>, vector<8x32xf32> -> vector<8x32xf32>
    %96 = arith.addf %94, %95 : vector<8x32xf32>
    %97 = vector.broadcast %4 : vector<1x32xf32> to vector<8x32xf32>
    %98 = arith.addf %96, %97 : vector<8x32xf32>
    %99 = math.tanh %98 : vector<8x32xf32>
    %cst_53 = arith.constant dense<0.000000e+00> : vector<8x32xf32>
    %100 = tpu.matmul %99, %1, %cst_53 {dimension_numbers = #tpu.dot_dimension_numbers<[1], [0], [0], [1], [0, 0, 1, 1], [], []>} : vector<8x32xf32>, vector<32x32xf32>, vector<8x32xf32> -> vector<8x32xf32>
    %cst_54 = arith.constant dense<0.000000e+00> : vector<8x32xf32>
    %101 = tpu.matmul %91, %3, %cst_54 {dimension_numbers = #tpu.dot_dimension_numbers<[1], [0], [0], [1], [0, 0, 1, 1], [], []>} : vector<8x32xf32>, vector<32x32xf32>, vector<8x32xf32> -> vector<8x32xf32>
    %102 = arith.addf %100, %101 : vector<8x32xf32>
    %103 = vector.broadcast %5 : vector<1x32xf32> to vector<8x32xf32>
    %104 = arith.addf %102, %103 : vector<8x32xf32>
    %105 = math.tanh %104 : vector<8x32xf32>
    %c7 = arith.constant 7 : index
    %c0_55 = arith.constant 0 : index
    %c0_56 = arith.constant 0 : index
    %106 = vector.load %arg1[%c7, %c0_55, %c0_56] : memref<8x8x4xf32, #tpu.memory_space<vmem>>, vector<1x8x4xf32>
    %107 = vector.shape_cast %106 : vector<1x8x4xf32> to vector<8x4xf32>
    %cst_57 = arith.constant dense<0.000000e+00> : vector<8x32xf32>
    %108 = tpu.matmul %107, %0, %cst_57 {dimension_numbers = #tpu.dot_dimension_numbers<[1], [0], [0], [1], [0, 0, 1, 1], [], []>} : vector<8x4xf32>, vector<4x32xf32>, vector<8x32xf32> -> vector<8x32xf32>
    %cst_58 = arith.constant dense<0.000000e+00> : vector<8x32xf32>
    %109 = tpu.matmul %99, %2, %cst_58 {dimension_numbers = #tpu.dot_dimension_numbers<[1], [0], [0], [1], [0, 0, 1, 1], [], []>} : vector<8x32xf32>, vector<32x32xf32>, vector<8x32xf32> -> vector<8x32xf32>
    %110 = arith.addf %108, %109 : vector<8x32xf32>
    %111 = vector.broadcast %4 : vector<1x32xf32> to vector<8x32xf32>
    %112 = arith.addf %110, %111 : vector<8x32xf32>
    %113 = math.tanh %112 : vector<8x32xf32>
    %cst_59 = arith.constant dense<0.000000e+00> : vector<8x32xf32>
    %114 = tpu.matmul %113, %1, %cst_59 {dimension_numbers = #tpu.dot_dimension_numbers<[1], [0], [0], [1], [0, 0, 1, 1], [], []>} : vector<8x32xf32>, vector<32x32xf32>, vector<8x32xf32> -> vector<8x32xf32>
    %cst_60 = arith.constant dense<0.000000e+00> : vector<8x32xf32>
    %115 = tpu.matmul %105, %3, %cst_60 {dimension_numbers = #tpu.dot_dimension_numbers<[1], [0], [0], [1], [0, 0, 1, 1], [], []>} : vector<8x32xf32>, vector<32x32xf32>, vector<8x32xf32> -> vector<8x32xf32>
    %116 = arith.addf %114, %115 : vector<8x32xf32>
    %117 = vector.broadcast %5 : vector<1x32xf32> to vector<8x32xf32>
    %118 = arith.addf %116, %117 : vector<8x32xf32>
    %119 = math.tanh %118 : vector<8x32xf32>
    %c0_61 = arith.constant 0 : index
    %c0_62 = arith.constant 0 : index
    %120 = vector.load %arg8[%c0_61, %c0_62] : memref<1x32xf32, #tpu.memory_space<vmem>>, vector<1x32xf32>
    %121 = vector.broadcast %120 : vector<1x32xf32> to vector<8x32xf32>
    %122 = arith.mulf %119, %121 : vector<8x32xf32>
    %cst_63 = arith.constant dense<0.000000e+00> : vector<8xf32>
    %123 = vector.multi_reduction <add>, %122, %cst_63 [1] : vector<8x32xf32> to vector<8xf32>
    %124 = vector.shape_cast %123 : vector<8xf32> to vector<8x1xf32>
    %c0_64 = arith.constant 0 : index
    %c0_65 = arith.constant 0 : index
    %125 = vector.load %arg9[%c0_64, %c0_65] : memref<1x1xf32, #tpu.memory_space<vmem>>, vector<1x1xf32>
    %126 = vector.broadcast %125 : vector<1x1xf32> to vector<8x1xf32>
    %127 = arith.addf %124, %126 : vector<8x1xf32>
    %128 = math.tanh %127 : vector<8x1xf32>
    %c0_66 = arith.constant 0 : index
    %c0_67 = arith.constant 0 : index
    %129 = vector.load %arg10[%c0_66, %c0_67] : memref<8x1xf32, #tpu.memory_space<vmem>>, vector<8x1xf32>
    tpu.vector_store %arg10[%c0_66, %c0_67], %128 {strides = array<i32>} : memref<8x1xf32, #tpu.memory_space<vmem>>, vector<8x1xf32>,
    return
  }
  func.func @transform_0(%arg0: i32) -> (i32, i32, i32) {
    %c0_i32 = arith.constant 0 : i32
    %c0_i32_0 = arith.constant 0 : i32
    %c0_i32_1 = arith.constant 0 : i32
    return %c0_i32, %arg0, %c0_i32_0 : i32, i32, i32
  }
  func.func @transform_1(%arg0: i32) -> (i32, i32) {
    %c0_i32 = arith.constant 0 : i32
    %c0_i32_0 = arith.constant 0 : i32
    %c0_i32_1 = arith.constant 0 : i32
    return %c0_i32, %c0_i32_0 : i32, i32
  }
  func.func @transform_2(%arg0: i32) -> (i32, i32) {
    %c0_i32 = arith.constant 0 : i32
    %c0_i32_0 = arith.constant 0 : i32
    %c0_i32_1 = arith.constant 0 : i32
    return %c0_i32, %c0_i32_0 : i32, i32
  }
  func.func @transform_3(%arg0: i32) -> (i32, i32) {
    %c0_i32 = arith.constant 0 : i32
    %c0_i32_0 = arith.constant 0 : i32
    %c0_i32_1 = arith.constant 0 : i32
    return %c0_i32, %c0_i32_0 : i32, i32
  }
  func.func @transform_4(%arg0: i32) -> (i32, i32) {
    %c0_i32 = arith.constant 0 : i32
    %c0_i32_0 = arith.constant 0 : i32
    %c0_i32_1 = arith.constant 0 : i32
    return %c0_i32, %c0_i32_0 : i32, i32
  }
  func.func @transform_5(%arg0: i32) -> (i32, i32) {
    %c0_i32 = arith.constant 0 : i32
    %c0_i32_0 = arith.constant 0 : i32
    %c0_i32_1 = arith.constant 0 : i32
    return %c0_i32, %c0_i32_0 : i32, i32
  }
  func.func @transform_6(%arg0: i32) -> (i32, i32) {
    %c0_i32 = arith.constant 0 : i32
    %c0_i32_0 = arith.constant 0 : i32
    %c0_i32_1 = arith.constant 0 : i32
    return %c0_i32, %c0_i32_0 : i32, i32
  }
  func.func @transform_7(%arg0: i32) -> (i32, i32) {
    %c0_i32 = arith.constant 0 : i32
    %c0_i32_0 = arith.constant 0 : i32
    %c0_i32_1 = arith.constant 0 : i32
    return %c0_i32, %c0_i32_0 : i32, i32
  }
  func.func @transform_8(%arg0: i32) -> (i32, i32) {
    %c0_i32 = arith.constant 0 : i32
    %c0_i32_0 = arith.constant 0 : i32
    %c0_i32_1 = arith.constant 0 : i32
    return %c0_i32, %c0_i32_0 : i32, i32
  }
  func.func @transform_9(%arg0: i32) -> (i32, i32) {
    %c0_i32 = arith.constant 0 : i32
    %c0_i32_0 = arith.constant 0 : i32
    return %arg0, %c0_i32 : i32, i32
  }
}

</mosaic_0001>

<llo_original>
// kernel: rnn_forward.1
$region0: #{rnn_forward.1}
  #allocation0 [shape = 'u32[]', space=smem, size = 0x4, offset = 0x4, fixed_abs, tag = 'smem constant byte address 0x4 - core index']
  #allocation1 [shape = 'u32[72,128]{1,0:T(1,128)}', space=vmem, size = 0x9000, scoped, tag = 'internal scratch']
  #allocation2 [shape = 'f32[1,1]{1,0:T(1,128)S(1)}', space=vmem, size = 0x200, scoped, tag = 'scoped memory for rnn_forward.1']
  %s0 = inlined_call_operand.vmem [shape: f32[8,8,4], index: 0, kind: input, shape index: {}]
  %s1 = inlined_call_operand.vmem [shape: f32[4,32], index: 1, kind: input, shape index: {}]
  %s2 = inlined_call_operand.vmem [shape: f32[32,32], index: 2, kind: input, shape index: {}]
  %s3 = inlined_call_operand.vmem [shape: f32[1,32], index: 3, kind: input, shape index: {}]
  %s4 = inlined_call_operand.vmem [shape: f32[32,32], index: 4, kind: input, shape index: {}]
  %s5 = inlined_call_operand.vmem [shape: f32[32,32], index: 5, kind: input, shape index: {}]
  %s6 = inlined_call_operand.vmem [shape: f32[1,32], index: 6, kind: input, shape index: {}]
  %s7 = inlined_call_operand.vmem [shape: f32[1,32], index: 7, kind: input, shape index: {}]
  %s8 = inlined_call_operand.<no memory space> [shape: f32[1,1], index: 8, kind: input, shape index: {}]
  %s9 = inlined_call_operand.vmem [shape: f32[8,1], index: 9, kind: output, shape index: {}]
  %s10 = sld [smem:[#allocation0]]
  $region46: #{rnn_forward.1} parent=0
    _
  %s12 = ssub.s32 1, %s10
  %s13 = scalar_select 0, %s12, %s10
  %v14 = vstv %s8
  %15 = vst [vmem:[#allocation2] sm:$0x1] %v14
  // Predicated region
  $region2: #{rnn_forward.1} parent=0 // pred_check
    _
  $region3: #{rnn_forward.1} parent=0 // pred_check_branch
    %17 = sbr.rel (0) target = $region5
  $region4: #{rnn_forward.1} parent=0 // pred_region
    _
  $region5: #{rnn_forward.1} parent=0 // pred_fallthru
    _
  // Predicated region
  $region6: #{rnn_forward.1} parent=0 // pred_check
    _
  $region7: #{rnn_forward.1} parent=0 // pred_check_branch
    %19 = sbr.rel (0) target = $region9
  $region8: #{rnn_forward.1} parent=0 // pred_region
    _
  $region9: #{rnn_forward.1} parent=0 // pred_fallthru
    _
  // Predicated region
  $region10: #{rnn_forward.1} parent=0 // pred_check
    _
  $region11: #{rnn_forward.1} parent=0 // pred_check_branch
    %21 = sbr.rel (0) target = $region13
  $region12: #{rnn_forward.1} parent=0 // pred_region
    _
  $region13: #{rnn_forward.1} parent=0 // pred_fallthru
    _
  // Predicated region
  $region14: #{rnn_forward.1} parent=0 // pred_check
    _
  $region15: #{rnn_forward.1} parent=0 // pred_check_branch
    %23 = sbr.rel (0) target = $region17
  $region16: #{rnn_forward.1} parent=0 // pred_region
    _
  $region17: #{rnn_forward.1} parent=0 // pred_fallthru
    _
  // Predicated region
  $region18: #{rnn_forward.1} parent=0 // pred_check
    _
  $region19: #{rnn_forward.1} parent=0 // pred_check_branch
    %25 = sbr.rel (0) target = $region21
  $region20: #{rnn_forward.1} parent=0 // pred_region
    _
  $region21: #{rnn_forward.1} parent=0 // pred_fallthru
    _
  // Predicated region
  $region22: #{rnn_forward.1} parent=0 // pred_check
    _
  $region23: #{rnn_forward.1} parent=0 // pred_check_branch
    %27 = sbr.rel (0) target = $region25
  $region24: #{rnn_forward.1} parent=0 // pred_region
    _
  $region25: #{rnn_forward.1} parent=0 // pred_fallthru
    _
  // Predicated region
  $region26: #{rnn_forward.1} parent=0 // pred_check
    _
  $region27: #{rnn_forward.1} parent=0 // pred_check_branch
    %29 = sbr.rel (0) target = $region29
  $region28: #{rnn_forward.1} parent=0 // pred_region
    _
  $region29: #{rnn_forward.1} parent=0 // pred_fallthru
    _
  // Predicated region
  $region30: #{rnn_forward.1} parent=0 // pred_check
    _
  $region31: #{rnn_forward.1} parent=0 // pred_check_branch
    %31 = sbr.rel (0) target = $region33
  $region32: #{rnn_forward.1} parent=0 // pred_region
    _
  $region33: #{rnn_forward.1} parent=0 // pred_fallthru
    _
  // Predicated region
  $region34: #{rnn_forward.1} parent=0 // pred_check
    _
  $region35: #{rnn_forward.1} parent=0 // pred_check_branch
    %33 = sbr.rel (0) target = $region37
  $region36: #{rnn_forward.1} parent=0 // pred_region
    _
  $region37: #{rnn_forward.1} parent=0 // pred_fallthru
    _
  %v34 = vld [vmem:[%s1] sm:$0xf]
  %v35 = vld [vmem:[%s4] sm:$0xff]
  %v36 = vld [vmem:[%s4 + $0x8] sm:$0xff]
  %v37 = vld [vmem:[%s4 + $0x10] sm:$0xff]
  %v38 = vld [vmem:[%s4 + $0x18] sm:$0xff]
  %v39 = vld [vmem:[%s2] sm:$0xff]
  %v40 = vld [vmem:[%s2 + $0x8] sm:$0xff]
  %v41 = vld [vmem:[%s2 + $0x10] sm:$0xff]
  %v42 = vld [vmem:[%s2 + $0x18] sm:$0xff]
  %v43 = vld [vmem:[%s5] sm:$0xff]
  %v44 = vld [vmem:[%s5 + $0x8] sm:$0xff]
  %v45 = vld [vmem:[%s5 + $0x10] sm:$0xff]
  %v46 = vld [vmem:[%s5 + $0x18] sm:$0xff]
  %v47 = vld [vmem:[%s3] sm:$0x1]
  %v48 = vld [vmem:[%s6] sm:$0x1]
  %v49 = vld [vmem:[%s0] sm:$0xff]
  %vm50 = vcmask 261120
  %v52 = vsel %vm50, 0.0, 0
  %54 = vmatpush.msra.mxu0 0.0
  %55 = vmatpush.msra.mxu0 0.0
  %56 = vmatpush.msra.mxu0 0.0
  %57 = vmatpush.msra.mxu0 0.0
  %58 = vmatpush.msra.mxu0 0.0
  %59 = vmatpush.msra.mxu0 0.0
  %60 = vmatpush.msra.mxu0 0.0
  %61 = vmatpush.msra.mxu0 0.0
  %62 = vmatpush.msra.mxu0 0.0
  %63 = vmatpush.msra.mxu0 0.0
  %64 = vmatpush.msra.mxu0 0.0
  %65 = vmatpush.msra.mxu0 0.0
  %66 = vmatpush.msra.mxu0 %v42
  %67 = vmatpush.msra.mxu0 %v41
  %68 = vmatpush.msra.mxu0 %v40
  %69 = vmatpush.msra.mxu0 %v39
  %70 = vmatmul.f32.gmra.mxu0 %v52
  %v71 = vpop.f32.mrf.mxu0
  %v72 = vadd.f32 0.0, %v71
  %73 = vdwg.mxu0
  %vm74 = vcmask 31744
  %v76 = vsel %vm74, %v49, 0
  %vm78 = vcmask 1043456
  %v80 = vsel %vm78, %v34, 0
  %82 = vmatpush.msra.mxu0 0.0
  %83 = vmatpush.msra.mxu0 0.0
  %84 = vmatpush.msra.mxu0 0.0
  %85 = vmatpush.msra.mxu0 0.0
  %86 = vmatpush.msra.mxu0 0.0
  %87 = vmatpush.msra.mxu0 0.0
  %88 = vmatpush.msra.mxu0 0.0
  %89 = vmatpush.msra.mxu0 0.0
  %90 = vmatpush.msra.mxu0 0.0
  %91 = vmatpush.msra.mxu0 0.0
  %92 = vmatpush.msra.mxu0 0.0
  %93 = vmatpush.msra.mxu0 0.0
  %94 = vmatpush.msra.mxu0 0.0
  %95 = vmatpush.msra.mxu0 0.0
  %96 = vmatpush.msra.mxu0 0.0
  %97 = vmatpush.msra.mxu0 %v80
  %98 = vmatmul.f32.gmra.mxu0 %v76
  %v99 = vpop.f32.mrf.mxu0
  %v100 = vadd.f32 %v72, %v99
  %101 = vdwg.mxu0
  %v103 = vperm.slane %v47, 0
  %v105 = vadd.f32 %v100, %v103
  %v106 = vtanh.pop %v105
  %107 = vmatpush.msra.mxu0 0.0
  %108 = vmatpush.msra.mxu0 0.0
  %109 = vmatpush.msra.mxu0 0.0
  %110 = vmatpush.msra.mxu0 0.0
  %111 = vmatpush.msra.mxu0 0.0
  %112 = vmatpush.msra.mxu0 0.0
  %113 = vmatpush.msra.mxu0 0.0
  %114 = vmatpush.msra.mxu0 0.0
  %115 = vmatpush.msra.mxu0 0.0
  %116 = vmatpush.msra.mxu0 0.0
  %117 = vmatpush.msra.mxu0 0.0
  %118 = vmatpush.msra.mxu0 0.0
  %119 = vmatpush.msra.mxu0 %v46
  %120 = vmatpush.msra.mxu0 %v45
  %121 = vmatpush.msra.mxu0 %v44
  %122 = vmatpush.msra.mxu0 %v43
  %123 = vmatmul.f32.gmra.mxu0 %v52
  %v124 = vpop.f32.mrf.mxu0
  %v125 = vadd.f32 0.0, %v124
  %126 = vdwg.mxu0
  %v128 = vsel %vm50, %v106, 0
  %130 = vmatpush.msra.mxu0 0.0
  %131 = vmatpush.msra.mxu0 0.0
  %132 = vmatpush.msra.mxu0 0.0
  %133 = vmatpush.msra.mxu0 0.0
  %134 = vmatpush.msra.mxu0 0.0
  %135 = vmatpush.msra.mxu0 0.0
  %136 = vmatpush.msra.mxu0 0.0
  %137 = vmatpush.msra.mxu0 0.0
  %138 = vmatpush.msra.mxu0 0.0
  %139 = vmatpush.msra.mxu0 0.0
  %140 = vmatpush.msra.mxu0 0.0
  %141 = vmatpush.msra.mxu0 0.0
  %142 = vmatpush.msra.mxu0 %v38
  %143 = vmatpush.msra.mxu0 %v37
  %144 = vmatpush.msra.mxu0 %v36
  %145 = vmatpush.msra.mxu0 %v35
  %146 = vmatmul.f32.gmra.mxu0 %v128
  %v147 = vpop.f32.mrf.mxu0
  %v148 = vadd.f32 %v125, %v147
  %149 = vdwg.mxu0
  %v151 = vperm.slane %v48, 0
  %v153 = vadd.f32 %v148, %v151
  %v154 = vtanh.pop %v153
  %s155 = scalar_lea.vmem %s0, 8
  %v156 = vld [vmem:[%s155] sm:$0xff]
  %157 = vmatpush.msra.mxu0 0.0
  %158 = vmatpush.msra.mxu0 0.0
  %159 = vmatpush.msra.mxu0 0.0
  %160 = vmatpush.msra.mxu0 0.0
  %161 = vmatpush.msra.mxu0 0.0
  %162 = vmatpush.msra.mxu0 0.0
  %163 = vmatpush.msra.mxu0 0.0
  %164 = vmatpush.msra.mxu0 0.0
  %165 = vmatpush.msra.mxu0 0.0
  %166 = vmatpush.msra.mxu0 0.0
  %167 = vmatpush.msra.mxu0 0.0
  %168 = vmatpush.msra.mxu0 0.0
  %169 = vmatpush.msra.mxu0 %v42
  %170 = vmatpush.msra.mxu0 %v41
  %171 = vmatpush.msra.mxu0 %v40
  %172 = vmatpush.msra.mxu0 %v39
  %173 = vmatmul.f32.gmra.mxu0 %v128
  %v174 = vpop.f32.mrf.mxu0
  %v175 = vadd.f32 0.0, %v174
  %176 = vdwg.mxu0
  %v178 = vsel %vm74, %v156, 0
  %180 = vmatpush.msra.mxu0 0.0
  %181 = vmatpush.msra.mxu0 0.0
  %182 = vmatpush.msra.mxu0 0.0
  %183 = vmatpush.msra.mxu0 0.0
  %184 = vmatpush.msra.mxu0 0.0
  %185 = vmatpush.msra.mxu0 0.0
  %186 = vmatpush.msra.mxu0 0.0
  %187 = vmatpush.msra.mxu0 0.0
  %188 = vmatpush.msra.mxu0 0.0
  %189 = vmatpush.msra.mxu0 0.0
  %190 = vmatpush.msra.mxu0 0.0
  %191 = vmatpush.msra.mxu0 0.0
  %192 = vmatpush.msra.mxu0 0.0
  %193 = vmatpush.msra.mxu0 0.0
  %194 = vmatpush.msra.mxu0 0.0
  %195 = vmatpush.msra.mxu0 %v80
  %196 = vmatmul.f32.gmra.mxu0 %v178
  %v197 = vpop.f32.mrf.mxu0
  %v198 = vadd.f32 %v175, %v197
  %199 = vdwg.mxu0
  %v200 = vadd.f32 %v198, %v103
  %v201 = vtanh.pop %v200
  %v203 = vsel %vm50, %v154, 0
  %205 = vmatpush.msra.mxu0 0.0
  %206 = vmatpush.msra.mxu0 0.0
  %207 = vmatpush.msra.mxu0 0.0
  %208 = vmatpush.msra.mxu0 0.0
  %209 = vmatpush.msra.mxu0 0.0
  %210 = vmatpush.msra.mxu0 0.0
  %211 = vmatpush.msra.mxu0 0.0
  %212 = vmatpush.msra.mxu0 0.0
  %213 = vmatpush.msra.mxu0 0.0
  %214 = vmatpush.msra.mxu0 0.0
  %215 = vmatpush.msra.mxu0 0.0
  %216 = vmatpush.msra.mxu0 0.0
  %217 = vmatpush.msra.mxu0 %v46
  %218 = vmatpush.msra.mxu0 %v45
  %219 = vmatpush.msra.mxu0 %v44
  %220 = vmatpush.msra.mxu0 %v43
  %221 = vmatmul.f32.gmra.mxu0 %v203
  %v222 = vpop.f32.mrf.mxu0
  %v223 = vadd.f32 0.0, %v222
  %224 = vdwg.mxu0
  %v226 = vsel %vm50, %v201, 0
  %228 = vmatpush.msra.mxu0 0.0
  %229 = vmatpush.msra.mxu0 0.0
  %230 = vmatpush.msra.mxu0 0.0
  %231 = vmatpush.msra.mxu0 0.0
  %232 = vmatpush.msra.mxu0 0.0
  %233 = vmatpush.msra.mxu0 0.0
  %234 = vmatpush.msra.mxu0 0.0
  %235 = vmatpush.msra.mxu0 0.0
  %236 = vmatpush.msra.mxu0 0.0
  %237 = vmatpush.msra.mxu0 0.0
  %238 = vmatpush.msra.mxu0 0.0
  %239 = vmatpush.msra.mxu0 0.0
  %240 = vmatpush.msra.mxu0 %v38
  %241 = vmatpush.msra.mxu0 %v37
  %242 = vmatpush.msra.mxu0 %v36
  %243 = vmatpush.msra.mxu0 %v35
  %244 = vmatmul.f32.gmra.mxu0 %v226
  %v245 = vpop.f32.mrf.mxu0
  %v246 = vadd.f32 %v223, %v245
  %247 = vdwg.mxu0
  %v248 = vadd.f32 %v246, %v151
  %v249 = vtanh.pop %v248
  %s250 = scalar_lea.vmem %s0, 16
  %v251 = vld [vmem:[%s250] sm:$0xff]
  %252 = vmatpush.msra.mxu0 0.0
  %253 = vmatpush.msra.mxu0 0.0
  %254 = vmatpush.msra.mxu0 0.0
  %255 = vmatpush.msra.mxu0 0.0
  %256 = vmatpush.msra.mxu0 0.0
  %257 = vmatpush.msra.mxu0 0.0
  %258 = vmatpush.msra.mxu0 0.0
  %259 = vmatpush.msra.mxu0 0.0
  %260 = vmatpush.msra.mxu0 0.0
  %261 = vmatpush.msra.mxu0 0.0
  %262 = vmatpush.msra.mxu0 0.0
  %263 = vmatpush.msra.mxu0 0.0
  %264 = vmatpush.msra.mxu0 %v42
  %265 = vmatpush.msra.mxu0 %v41
  %266 = vmatpush.msra.mxu0 %v40
  %267 = vmatpush.msra.mxu0 %v39
  %268 = vmatmul.f32.gmra.mxu0 %v226
  %v269 = vpop.f32.mrf.mxu0
  %v270 = vadd.f32 0.0, %v269
  %271 = vdwg.mxu0
  %v273 = vsel %vm74, %v251, 0
  %275 = vmatpush.msra.mxu0 0.0
  %276 = vmatpush.msra.mxu0 0.0
  %277 = vmatpush.msra.mxu0 0.0
  %278 = vmatpush.msra.mxu0 0.0
  %279 = vmatpush.msra.mxu0 0.0
  %280 = vmatpush.msra.mxu0 0.0
  %281 = vmatpush.msra.mxu0 0.0
  %282 = vmatpush.msra.mxu0 0.0
  %283 = vmatpush.msra.mxu0 0.0
  %284 = vmatpush.msra.mxu0 0.0
  %285 = vmatpush.msra.mxu0 0.0
  %286 = vmatpush.msra.mxu0 0.0
  %287 = vmatpush.msra.mxu0 0.0
  %288 = vmatpush.msra.mxu0 0.0
  %289 = vmatpush.msra.mxu0 0.0
  %290 = vmatpush.msra.mxu0 %v80
  %291 = vmatmul.f32.gmra.mxu0 %v273
  %v292 = vpop.f32.mrf.mxu0
  %v293 = vadd.f32 %v270, %v292
  %294 = vdwg.mxu0
  %v295 = vadd.f32 %v293, %v103
  %v296 = vtanh.pop %v295
  %v298 = vsel %vm50, %v249, 0
  %300 = vmatpush.msra.mxu0 0.0
  %301 = vmatpush.msra.mxu0 0.0
  %302 = vmatpush.msra.mxu0 0.0
  %303 = vmatpush.msra.mxu0 0.0
  %304 = vmatpush.msra.mxu0 0.0
  %305 = vmatpush.msra.mxu0 0.0
  %306 = vmatpush.msra.mxu0 0.0
  %307 = vmatpush.msra.mxu0 0.0
  %308 = vmatpush.msra.mxu0 0.0
  %309 = vmatpush.msra.mxu0 0.0
  %310 = vmatpush.msra.mxu0 0.0
  %311 = vmatpush.msra.mxu0 0.0
  %312 = vmatpush.msra.mxu0 %v46
  %313 = vmatpush.msra.mxu0 %v45
  %314 = vmatpush.msra.mxu0 %v44
  %315 = vmatpush.msra.mxu0 %v43
  %316 = vmatmul.f32.gmra.mxu0 %v298
  %v317 = vpop.f32.mrf.mxu0
  %v318 = vadd.f32 0.0, %v317
  %319 = vdwg.mxu0
  %v321 = vsel %vm50, %v296, 0
  %323 = vmatpush.msra.mxu0 0.0
  %324 = vmatpush.msra.mxu0 0.0
  %325 = vmatpush.msra.mxu0 0.0
  %326 = vmatpush.msra.mxu0 0.0
  %327 = vmatpush.msra.mxu0 0.0
  %328 = vmatpush.msra.mxu0 0.0
  %329 = vmatpush.msra.mxu0 0.0
  %330 = vmatpush.msra.mxu0 0.0
  %331 = vmatpush.msra.mxu0 0.0
  %332 = vmatpush.msra.mxu0 0.0
  %333 = vmatpush.msra.mxu0 0.0
  %334 = vmatpush.msra.mxu0 0.0
  %335 = vmatpush.msra.mxu0 %v38
  %336 = vmatpush.msra.mxu0 %v37
  %337 = vmatpush.msra.mxu0 %v36
  %338 = vmatpush.msra.mxu0 %v35
  %339 = vmatmul.f32.gmra.mxu0 %v321
  %v340 = vpop.f32.mrf.mxu0
  %v341 = vadd.f32 %v318, %v340
  %342 = vdwg.mxu0
  %v343 = vadd.f32 %v341, %v151
  %v344 = vtanh.pop %v343
  %s345 = scalar_lea.vmem %s0, 24
  %v346 = vld [vmem:[%s345] sm:$0xff]
  %347 = vmatpush.msra.mxu0 0.0
  %348 = vmatpush.msra.mxu0 0.0
  %349 = vmatpush.msra.mxu0 0.0
  %350 = vmatpush.msra.mxu0 0.0
  %351 = vmatpush.msra.mxu0 0.0
  %352 = vmatpush.msra.mxu0 0.0
  %353 = vmatpush.msra.mxu0 0.0
  %354 = vmatpush.msra.mxu0 0.0
  %355 = vmatpush.msra.mxu0 0.0
  %356 = vmatpush.msra.mxu0 0.0
  %357 = vmatpush.msra.mxu0 0.0
  %358 = vmatpush.msra.mxu0 0.0
  %359 = vmatpush.msra.mxu0 %v42
  %360 = vmatpush.msra.mxu0 %v41
  %361 = vmatpush.msra.mxu0 %v40
  %362 = vmatpush.msra.mxu0 %v39
  %363 = vmatmul.f32.gmra.mxu0 %v321
  %v364 = vpop.f32.mrf.mxu0
  %v365 = vadd.f32 0.0, %v364
  %366 = vdwg.mxu0
  %v368 = vsel %vm74, %v346, 0
  %370 = vmatpush.msra.mxu0 0.0
  %371 = vmatpush.msra.mxu0 0.0
  %372 = vmatpush.msra.mxu0 0.0
  %373 = vmatpush.msra.mxu0 0.0
  %374 = vmatpush.msra.mxu0 0.0
  %375 = vmatpush.msra.mxu0 0.0
  %376 = vmatpush.msra.mxu0 0.0
  %377 = vmatpush.msra.mxu0 0.0
  %378 = vmatpush.msra.mxu0 0.0
  %379 = vmatpush.msra.mxu0 0.0
  %380 = vmatpush.msra.mxu0 0.0
  %381 = vmatpush.msra.mxu0 0.0
  %382 = vmatpush.msra.mxu0 0.0
  %383 = vmatpush.msra.mxu0 0.0
  %384 = vmatpush.msra.mxu0 0.0
  %385 = vmatpush.msra.mxu0 %v80
  %386 = vmatmul.f32.gmra.mxu0 %v368
  %v387 = vpop.f32.mrf.mxu0
  %v388 = vadd.f32 %v365, %v387
  %389 = vdwg.mxu0
  %v390 = vadd.f32 %v388, %v103
  %v391 = vtanh.pop %v390
  %v393 = vsel %vm50, %v344, 0
  %395 = vmatpush.msra.mxu0 0.0
  %396 = vmatpush.msra.mxu0 0.0
  %397 = vmatpush.msra.mxu0 0.0
  %398 = vmatpush.msra.mxu0 0.0
  %399 = vmatpush.msra.mxu0 0.0
  %400 = vmatpush.msra.mxu0 0.0
  %401 = vmatpush.msra.mxu0 0.0
  %402 = vmatpush.msra.mxu0 0.0
  %403 = vmatpush.msra.mxu0 0.0
  %404 = vmatpush.msra.mxu0 0.0
  %405 = vmatpush.msra.mxu0 0.0
  %406 = vmatpush.msra.mxu0 0.0
  %407 = vmatpush.msra.mxu0 %v46
  %408 = vmatpush.msra.mxu0 %v45
  %409 = vmatpush.msra.mxu0 %v44
  %410 = vmatpush.msra.mxu0 %v43
  %411 = vmatmul.f32.gmra.mxu0 %v393
  %v412 = vpop.f32.mrf.mxu0
  %v413 = vadd.f32 0.0, %v412
  %414 = vdwg.mxu0
  %v416 = vsel %vm50, %v391, 0
  %418 = vmatpush.msra.mxu0 0.0
  %419 = vmatpush.msra.mxu0 0.0
  %420 = vmatpush.msra.mxu0 0.0
  %421 = vmatpush.msra.mxu0 0.0
  %422 = vmatpush.msra.mxu0 0.0
  %423 = vmatpush.msra.mxu0 0.0
  %424 = vmatpush.msra.mxu0 0.0
  %425 = vmatpush.msra.mxu0 0.0
  %426 = vmatpush.msra.mxu0 0.0
  %427 = vmatpush.msra.mxu0 0.0
  %428 = vmatpush.msra.mxu0 0.0
  %429 = vmatpush.msra.mxu0 0.0
  %430 = vmatpush.msra.mxu0 %v38
  %431 = vmatpush.msra.mxu0 %v37
  %432 = vmatpush.msra.mxu0 %v36
  %433 = vmatpush.msra.mxu0 %v35
  %434 = vmatmul.f32.gmra.mxu0 %v416
  %v435 = vpop.f32.mrf.mxu0
  %v436 = vadd.f32 %v413, %v435
  %437 = vdwg.mxu0
  %v438 = vadd.f32 %v436, %v151
  %v439 = vtanh.pop %v438
  %s440 = scalar_lea.vmem %s0, 32
  %v441 = vld [vmem:[%s440] sm:$0xff]
  %442 = vmatpush.msra.mxu0 0.0
  %443 = vmatpush.msra.mxu0 0.0
  %444 = vmatpush.msra.mxu0 0.0
  %445 = vmatpush.msra.mxu0 0.0
  %446 = vmatpush.msra.mxu0 0.0
  %447 = vmatpush.msra.mxu0 0.0
  %448 = vmatpush.msra.mxu0 0.0
  %449 = vmatpush.msra.mxu0 0.0
  %450 = vmatpush.msra.mxu0 0.0
  %451 = vmatpush.msra.mxu0 0.0
  %452 = vmatpush.msra.mxu0 0.0
  %453 = vmatpush.msra.mxu0 0.0
  %454 = vmatpush.msra.mxu0 %v42
  %455 = vmatpush.msra.mxu0 %v41
  %456 = vmatpush.msra.mxu0 %v40
  %457 = vmatpush.msra.mxu0 %v39
  %458 = vmatmul.f32.gmra.mxu0 %v416
  %v459 = vpop.f32.mrf.mxu0
  %v460 = vadd.f32 0.0, %v459
  %461 = vdwg.mxu0
  %v463 = vsel %vm74, %v441, 0
  %465 = vmatpush.msra.mxu0 0.0
  %466 = vmatpush.msra.mxu0 0.0
  %467 = vmatpush.msra.mxu0 0.0
  %468 = vmatpush.msra.mxu0 0.0
  %469 = vmatpush.msra.mxu0 0.0
  %470 = vmatpush.msra.mxu0 0.0
  %471 = vmatpush.msra.mxu0 0.0
  %472 = vmatpush.msra.mxu0 0.0
  %473 = vmatpush.msra.mxu0 0.0
  %474 = vmatpush.msra.mxu0 0.0
  %475 = vmatpush.msra.mxu0 0.0
  %476 = vmatpush.msra.mxu0 0.0
  %477 = vmatpush.msra.mxu0 0.0
  %478 = vmatpush.msra.mxu0 0.0
  %479 = vmatpush.msra.mxu0 0.0
  %480 = vmatpush.msra.mxu0 %v80
  %481 = vmatmul.f32.gmra.mxu0 %v463
  %v482 = vpop.f32.mrf.mxu0
  %v483 = vadd.f32 %v460, %v482
  %484 = vdwg.mxu0
  %v485 = vadd.f32 %v483, %v103
  %v486 = vtanh.pop %v485
  %v488 = vsel %vm50, %v439, 0
  %490 = vmatpush.msra.mxu0 0.0
  %491 = vmatpush.msra.mxu0 0.0
  %492 = vmatpush.msra.mxu0 0.0
  %493 = vmatpush.msra.mxu0 0.0
  %494 = vmatpush.msra.mxu0 0.0
  %495 = vmatpush.msra.mxu0 0.0
  %496 = vmatpush.msra.mxu0 0.0
  %497 = vmatpush.msra.mxu0 0.0
  %498 = vmatpush.msra.mxu0 0.0
  %499 = vmatpush.msra.mxu0 0.0
  %500 = vmatpush.msra.mxu0 0.0
  %501 = vmatpush.msra.mxu0 0.0
  %502 = vmatpush.msra.mxu0 %v46
  %503 = vmatpush.msra.mxu0 %v45
  %504 = vmatpush.msra.mxu0 %v44
  %505 = vmatpush.msra.mxu0 %v43
  %506 = vmatmul.f32.gmra.mxu0 %v488
  %v507 = vpop.f32.mrf.mxu0
  %v508 = vadd.f32 0.0, %v507
  %509 = vdwg.mxu0
  %v511 = vsel %vm50, %v486, 0
  %513 = vmatpush.msra.mxu0 0.0
  %514 = vmatpush.msra.mxu0 0.0
  %515 = vmatpush.msra.mxu0 0.0
  %516 = vmatpush.msra.mxu0 0.0
  %517 = vmatpush.msra.mxu0 0.0
  %518 = vmatpush.msra.mxu0 0.0
  %519 = vmatpush.msra.mxu0 0.0
  %520 = vmatpush.msra.mxu0 0.0
  %521 = vmatpush.msra.mxu0 0.0
  %522 = vmatpush.msra.mxu0 0.0
  %523 = vmatpush.msra.mxu0 0.0
  %524 = vmatpush.msra.mxu0 0.0
  %525 = vmatpush.msra.mxu0 %v38
  %526 = vmatpush.msra.mxu0 %v37
  %527 = vmatpush.msra.mxu0 %v36
  %528 = vmatpush.msra.mxu0 %v35
  %529 = vmatmul.f32.gmra.mxu0 %v511
  %v530 = vpop.f32.mrf.mxu0
  %v531 = vadd.f32 %v508, %v530
  %532 = vdwg.mxu0
  %v533 = vadd.f32 %v531, %v151
  %v534 = vtanh.pop %v533
  %s535 = scalar_lea.vmem %s0, 40
  %v536 = vld [vmem:[%s535] sm:$0xff]
  %537 = vmatpush.msra.mxu0 0.0
  %538 = vmatpush.msra.mxu0 0.0
  %539 = vmatpush.msra.mxu0 0.0
  %540 = vmatpush.msra.mxu0 0.0
  %541 = vmatpush.msra.mxu0 0.0
  %542 = vmatpush.msra.mxu0 0.0
  %543 = vmatpush.msra.mxu0 0.0
  %544 = vmatpush.msra.mxu0 0.0
  %545 = vmatpush.msra.mxu0 0.0
  %546 = vmatpush.msra.mxu0 0.0
  %547 = vmatpush.msra.mxu0 0.0
  %548 = vmatpush.msra.mxu0 0.0
  %549 = vmatpush.msra.mxu0 %v42
  %550 = vmatpush.msra.mxu0 %v41
  %551 = vmatpush.msra.mxu0 %v40
  %552 = vmatpush.msra.mxu0 %v39
  %553 = vmatmul.f32.gmra.mxu0 %v511
  %v554 = vpop.f32.mrf.mxu0
  %v555 = vadd.f32 0.0, %v554
  %556 = vdwg.mxu0
  %v558 = vsel %vm74, %v536, 0
  %560 = vmatpush.msra.mxu0 0.0
  %561 = vmatpush.msra.mxu0 0.0
  %562 = vmatpush.msra.mxu0 0.0
  %563 = vmatpush.msra.mxu0 0.0
  %564 = vmatpush.msra.mxu0 0.0
  %565 = vmatpush.msra.mxu0 0.0
  %566 = vmatpush.msra.mxu0 0.0
  %567 = vmatpush.msra.mxu0 0.0
  %568 = vmatpush.msra.mxu0 0.0
  %569 = vmatpush.msra.mxu0 0.0
  %570 = vmatpush.msra.mxu0 0.0
  %571 = vmatpush.msra.mxu0 0.0
  %572 = vmatpush.msra.mxu0 0.0
  %573 = vmatpush.msra.mxu0 0.0
  %574 = vmatpush.msra.mxu0 0.0
  %575 = vmatpush.msra.mxu0 %v80
  %576 = vmatmul.f32.gmra.mxu0 %v558
  %v577 = vpop.f32.mrf.mxu0
  %v578 = vadd.f32 %v555, %v577
  %579 = vdwg.mxu0
  %v580 = vadd.f32 %v578, %v103
  %v581 = vtanh.pop %v580
  %v583 = vsel %vm50, %v534, 0
  %585 = vmatpush.msra.mxu0 0.0
  %586 = vmatpush.msra.mxu0 0.0
  %587 = vmatpush.msra.mxu0 0.0
  %588 = vmatpush.msra.mxu0 0.0
  %589 = vmatpush.msra.mxu0 0.0
  %590 = vmatpush.msra.mxu0 0.0
  %591 = vmatpush.msra.mxu0 0.0
  %592 = vmatpush.msra.mxu0 0.0
  %593 = vmatpush.msra.mxu0 0.0
  %594 = vmatpush.msra.mxu0 0.0
  %595 = vmatpush.msra.mxu0 0.0
  %596 = vmatpush.msra.mxu0 0.0
  %597 = vmatpush.msra.mxu0 %v46
  %598 = vmatpush.msra.mxu0 %v45
  %599 = vmatpush.msra.mxu0 %v44
  %600 = vmatpush.msra.mxu0 %v43
  %601 = vmatmul.f32.gmra.mxu0 %v583
  %v602 = vpop.f32.mrf.mxu0
  %v603 = vadd.f32 0.0, %v602
  %604 = vdwg.mxu0
  %v606 = vsel %vm50, %v581, 0
  %608 = vmatpush.msra.mxu0 0.0
  %609 = vmatpush.msra.mxu0 0.0
  %610 = vmatpush.msra.mxu0 0.0
  %611 = vmatpush.msra.mxu0 0.0
  %612 = vmatpush.msra.mxu0 0.0
  %613 = vmatpush.msra.mxu0 0.0
  %614 = vmatpush.msra.mxu0 0.0
  %615 = vmatpush.msra.mxu0 0.0
  %616 = vmatpush.msra.mxu0 0.0
  %617 = vmatpush.msra.mxu0 0.0
  %618 = vmatpush.msra.mxu0 0.0
  %619 = vmatpush.msra.mxu0 0.0
  %620 = vmatpush.msra.mxu0 %v38
  %621 = vmatpush.msra.mxu0 %v37
  %622 = vmatpush.msra.mxu0 %v36
  %623 = vmatpush.msra.mxu0 %v35
  %624 = vmatmul.f32.gmra.mxu0 %v606
  %v625 = vpop.f32.mrf.mxu0
  %v626 = vadd.f32 %v603, %v625
  %627 = vdwg.mxu0
  %v628 = vadd.f32 %v626, %v151
  %v629 = vtanh.pop %v628
  %s630 = scalar_lea.vmem %s0, 48
  %v631 = vld [vmem:[%s630] sm:$0xff]
  %632 = vmatpush.msra.mxu0 0.0
  %633 = vmatpush.msra.mxu0 0.0
  %634 = vmatpush.msra.mxu0 0.0
  %635 = vmatpush.msra.mxu0 0.0
  %636 = vmatpush.msra.mxu0 0.0
  %637 = vmatpush.msra.mxu0 0.0
  %638 = vmatpush.msra.mxu0 0.0
  %639 = vmatpush.msra.mxu0 0.0
  %640 = vmatpush.msra.mxu0 0.0
  %641 = vmatpush.msra.mxu0 0.0
  %642 = vmatpush.msra.mxu0 0.0
  %643 = vmatpush.msra.mxu0 0.0
  %644 = vmatpush.msra.mxu0 %v42
  %645 = vmatpush.msra.mxu0 %v41
  %646 = vmatpush.msra.mxu0 %v40
  %647 = vmatpush.msra.mxu0 %v39
  %648 = vmatmul.f32.gmra.mxu0 %v606
  %v649 = vpop.f32.mrf.mxu0
  %v650 = vadd.f32 0.0, %v649
  %651 = vdwg.mxu0
  %v653 = vsel %vm74, %v631, 0
  %655 = vmatpush.msra.mxu0 0.0
  %656 = vmatpush.msra.mxu0 0.0
  %657 = vmatpush.msra.mxu0 0.0
  %658 = vmatpush.msra.mxu0 0.0
  %659 = vmatpush.msra.mxu0 0.0
  %660 = vmatpush.msra.mxu0 0.0
  %661 = vmatpush.msra.mxu0 0.0
  %662 = vmatpush.msra.mxu0 0.0
  %663 = vmatpush.msra.mxu0 0.0
  %664 = vmatpush.msra.mxu0 0.0
  %665 = vmatpush.msra.mxu0 0.0
  %666 = vmatpush.msra.mxu0 0.0
  %667 = vmatpush.msra.mxu0 0.0
  %668 = vmatpush.msra.mxu0 0.0
  %669 = vmatpush.msra.mxu0 0.0
  %670 = vmatpush.msra.mxu0 %v80
  %671 = vmatmul.f32.gmra.mxu0 %v653
  %v672 = vpop.f32.mrf.mxu0
  %v673 = vadd.f32 %v650, %v672
  %674 = vdwg.mxu0
  %v675 = vadd.f32 %v673, %v103
  %v676 = vtanh.pop %v675
  %v678 = vsel %vm50, %v629, 0
  %680 = vmatpush.msra.mxu0 0.0
  %681 = vmatpush.msra.mxu0 0.0
  %682 = vmatpush.msra.mxu0 0.0
  %683 = vmatpush.msra.mxu0 0.0
  %684 = vmatpush.msra.mxu0 0.0
  %685 = vmatpush.msra.mxu0 0.0
  %686 = vmatpush.msra.mxu0 0.0
  %687 = vmatpush.msra.mxu0 0.0
  %688 = vmatpush.msra.mxu0 0.0
  %689 = vmatpush.msra.mxu0 0.0
  %690 = vmatpush.msra.mxu0 0.0
  %691 = vmatpush.msra.mxu0 0.0
  %692 = vmatpush.msra.mxu0 %v46
  %693 = vmatpush.msra.mxu0 %v45
  %694 = vmatpush.msra.mxu0 %v44
  %695 = vmatpush.msra.mxu0 %v43
  %696 = vmatmul.f32.gmra.mxu0 %v678
  %v697 = vpop.f32.mrf.mxu0
  %v698 = vadd.f32 0.0, %v697
  %699 = vdwg.mxu0
  %v701 = vsel %vm50, %v676, 0
  %703 = vmatpush.msra.mxu0 0.0
  %704 = vmatpush.msra.mxu0 0.0
  %705 = vmatpush.msra.mxu0 0.0
  %706 = vmatpush.msra.mxu0 0.0
  %707 = vmatpush.msra.mxu0 0.0
  %708 = vmatpush.msra.mxu0 0.0
  %709 = vmatpush.msra.mxu0 0.0
  %710 = vmatpush.msra.mxu0 0.0
  %711 = vmatpush.msra.mxu0 0.0
  %712 = vmatpush.msra.mxu0 0.0
  %713 = vmatpush.msra.mxu0 0.0
  %714 = vmatpush.msra.mxu0 0.0
  %715 = vmatpush.msra.mxu0 %v38
  %716 = vmatpush.msra.mxu0 %v37
  %717 = vmatpush.msra.mxu0 %v36
  %718 = vmatpush.msra.mxu0 %v35
  %719 = vmatmul.f32.gmra.mxu0 %v701
  %v720 = vpop.f32.mrf.mxu0
  %v721 = vadd.f32 %v698, %v720
  %722 = vdwg.mxu0
  %v723 = vadd.f32 %v721, %v151
  %v724 = vtanh.pop %v723
  %s725 = scalar_lea.vmem %s0, 56
  %v726 = vld [vmem:[%s725] sm:$0xff]
  %727 = vmatpush.msra.mxu0 0.0
  %728 = vmatpush.msra.mxu0 0.0
  %729 = vmatpush.msra.mxu0 0.0
  %730 = vmatpush.msra.mxu0 0.0
  %731 = vmatpush.msra.mxu0 0.0
  %732 = vmatpush.msra.mxu0 0.0
  %733 = vmatpush.msra.mxu0 0.0
  %734 = vmatpush.msra.mxu0 0.0
  %735 = vmatpush.msra.mxu0 0.0
  %736 = vmatpush.msra.mxu0 0.0
  %737 = vmatpush.msra.mxu0 0.0
  %738 = vmatpush.msra.mxu0 0.0
  %739 = vmatpush.msra.mxu0 %v42
  %740 = vmatpush.msra.mxu0 %v41
  %741 = vmatpush.msra.mxu0 %v40
  %742 = vmatpush.msra.mxu0 %v39
  %743 = vmatmul.f32.gmra.mxu0 %v701
  %v744 = vpop.f32.mrf.mxu0
  %v745 = vadd.f32 0.0, %v744
  %746 = vdwg.mxu0
  %v748 = vsel %vm74, %v726, 0
  %750 = vmatpush.msra.mxu0 0.0
  %751 = vmatpush.msra.mxu0 0.0
  %752 = vmatpush.msra.mxu0 0.0
  %753 = vmatpush.msra.mxu0 0.0
  %754 = vmatpush.msra.mxu0 0.0
  %755 = vmatpush.msra.mxu0 0.0
  %756 = vmatpush.msra.mxu0 0.0
  %757 = vmatpush.msra.mxu0 0.0
  %758 = vmatpush.msra.mxu0 0.0
  %759 = vmatpush.msra.mxu0 0.0
  %760 = vmatpush.msra.mxu0 0.0
  %761 = vmatpush.msra.mxu0 0.0
  %762 = vmatpush.msra.mxu0 0.0
  %763 = vmatpush.msra.mxu0 0.0
  %764 = vmatpush.msra.mxu0 0.0
  %765 = vmatpush.msra.mxu0 %v80
  %766 = vmatmul.f32.gmra.mxu0 %v748
  %v767 = vpop.f32.mrf.mxu0
  %v768 = vadd.f32 %v745, %v767
  %769 = vdwg.mxu0
  %v770 = vadd.f32 %v768, %v103
  %v771 = vtanh.pop %v770
  %v773 = vsel %vm50, %v724, 0
  %775 = vmatpush.msra.mxu0 0.0
  %776 = vmatpush.msra.mxu0 0.0
  %777 = vmatpush.msra.mxu0 0.0
  %778 = vmatpush.msra.mxu0 0.0
  %779 = vmatpush.msra.mxu0 0.0
  %780 = vmatpush.msra.mxu0 0.0
  %781 = vmatpush.msra.mxu0 0.0
  %782 = vmatpush.msra.mxu0 0.0
  %783 = vmatpush.msra.mxu0 0.0
  %784 = vmatpush.msra.mxu0 0.0
  %785 = vmatpush.msra.mxu0 0.0
  %786 = vmatpush.msra.mxu0 0.0
  %787 = vmatpush.msra.mxu0 %v46
  %788 = vmatpush.msra.mxu0 %v45
  %789 = vmatpush.msra.mxu0 %v44
  %790 = vmatpush.msra.mxu0 %v43
  %791 = vmatmul.f32.gmra.mxu0 %v773
  %v792 = vpop.f32.mrf.mxu0
  %v793 = vadd.f32 0.0, %v792
  %794 = vdwg.mxu0
  %v796 = vsel %vm50, %v771, 0
  %798 = vmatpush.msra.mxu0 0.0
  %799 = vmatpush.msra.mxu0 0.0
  %800 = vmatpush.msra.mxu0 0.0
  %801 = vmatpush.msra.mxu0 0.0
  %802 = vmatpush.msra.mxu0 0.0
  %803 = vmatpush.msra.mxu0 0.0
  %804 = vmatpush.msra.mxu0 0.0
  %805 = vmatpush.msra.mxu0 0.0
  %806 = vmatpush.msra.mxu0 0.0
  %807 = vmatpush.msra.mxu0 0.0
  %808 = vmatpush.msra.mxu0 0.0
  %809 = vmatpush.msra.mxu0 0.0
  %810 = vmatpush.msra.mxu0 %v38
  %811 = vmatpush.msra.mxu0 %v37
  %812 = vmatpush.msra.mxu0 %v36
  %813 = vmatpush.msra.mxu0 %v35
  %814 = vmatmul.f32.gmra.mxu0 %v796
  %v815 = vpop.f32.mrf.mxu0
  %v816 = vadd.f32 %v793, %v815
  %817 = vdwg.mxu0
  %v818 = vadd.f32 %v816, %v151
  %v819 = vtanh.pop %v818
  %v820 = vld [vmem:[%s7] sm:$0x1]
  %v822 = vperm.slane %v820, 0
  %v824 = vmul.f32 %v819, %v822
  %v825 = vsel %vm50, %v824, 0.0
  %826 = vadd.xlane.f32.xlu0 %v825
  %v827 = vpop.xlane.xlu0 %826
  %v828 = vld [vmem:[#allocation2] sm:$0x1]
  %v830 = vperm.slane %v828, 0
  %v832 = vadd.f32 %v827, %v830
  %v833 = vtanh.pop %v832
  %vm834 = vcmask 7168
  %835 = vst.msk [vmem:[%s9] sm:$0xff] %vm834, %v833
  // Predicated region
  $region38: #{rnn_forward.1} parent=0 // pred_check
    _
  $region39: #{rnn_forward.1} parent=0 // pred_check_branch
    %837 = sbr.rel (0) target = $region41
  $region40: #{rnn_forward.1} parent=0 // pred_region
    _
  $region41: #{rnn_forward.1} parent=0 // pred_fallthru
    _
  // Predicated region
  $region42: #{rnn_forward.1} parent=0 // pred_check
    _
  $region43: #{rnn_forward.1} parent=0 // pred_check_branch
    %839 = sbr.rel (0) target = $region45
  $region44: #{rnn_forward.1} parent=0 // pred_region
    _
  $region45: #{rnn_forward.1} parent=0 // pred_fallthru
    _

</llo_original>
